<compile_context>
chip_gen: v5e
topology: v5e:2x2
jax: 0.10.0
libtpu: 0.0.40
codegen_flags: <defaults>
</compile_context>

<pallas_src>
import functools

import jax
import jax.numpy as jnp
from jax.experimental import pallas as pl
from jax.experimental.pallas import tpu as pltpu


def _round_up(x: int, m: int) -> int:
    return ((x + m - 1) // m) * m


def _cdiv(a: int, b: int) -> int:
    return -(-a // b)


def _pick_seg_block(num_segments: int, h_blk: int, target_rows: int = 256) -> int:
    """Segments per grid block: ~target_rows MXU rows per matmul, and >=2
    grid blocks when there is enough work (v7x has 2 TensorCores)."""
    nblk = max(1, _cdiv(num_segments, target_rows))
    if nblk == 1 and num_segments > 2 * h_blk:
        nblk = 2
    sb = _round_up(_cdiv(num_segments, nblk), h_blk)
    return max(sb, h_blk)


def _make_seg_linear_kernel(*, batch, seg_block, h_blk, hop, n_chunks, c_pad):
    """One grid step = one block of `seg_block` overlapping segments.

    Inputs per step (all auto-pipelined by BlockSpec):
      xm_ref: (batch, seg_block, hop) bf16   main chunks of this block
      xh_ref: (batch, h_blk, hop)    bf16   halo = first chunks of next block
      w_ref : (segment_length, c_pad) bf16
      b_ref : (1, c_pad)              f32
    Output:
      o_ref : (batch, seg_block, c_pad) f32  (accumulated in place)
    Scratch:
      win_ref: (batch, seg_block + h_blk, hop) bf16 staging window
    """

    def kernel(xm_ref, xh_ref, w_ref, b_ref, o_ref, win_ref):
        # Stage the chunk window once with full-slab, unmasked stores.
        win_ref[:, :seg_block, :] = xm_ref[...]
        if n_chunks > 1:
            win_ref[:, seg_block:seg_block + h_blk, :] = xh_ref[...]

        # Segment t of this block = chunks t .. t + n_chunks - 1, so each
        # phase j contributes window[:, j:j+seg_block, :] @ W_j.
        for j in range(n_chunks):
            w_j = w_ref[j * hop:(j + 1) * hop, :]              # (hop, c_pad) bf16
            for bi in range(batch):
                slab = win_ref[bi, j:j + seg_block, :]         # (seg_block, hop) bf16
                part = jnp.dot(slab, w_j,
                               preferred_element_type=jnp.float32)
                if j == 0:
                    o_ref[bi] = part + b_ref[...]              # bias broadcast
                else:
                    o_ref[bi] = o_ref[bi] + part

    return kernel


def _seg_linear(x, w, b, *, segment_length, hop_size, num_segments):
    """Linear 'model' over num_segments overlapping windows of x.
    Returns (batch, num_segments, num_classes) directly (no transpose)."""
    batch, input_length = x.shape
    seg_len_w, num_classes = w.shape
    assert seg_len_w == segment_length
    assert num_segments >= 1
    # TODO(synk): hop_size that does not divide segment_length needs a
    # per-segment gather fallback; PaSST-style configs (hop | segment) use the
    # chunked slab formulation below.
    assert segment_length % hop_size == 0, "kernel path requires hop | segment_length"

    hop = hop_size
    n_chunks = segment_length // hop

    h_blk = _round_up(max(n_chunks - 1, 1), 8)       # halo chunks (sublane aligned)
    seg_block = _pick_seg_block(num_segments, h_blk)
    s_pad = _round_up(num_segments, seg_block)
    num_blocks = s_pad // seg_block
    c_pad = _round_up(num_classes, 128)              # lane-dense output / MXU N dim

    # Chunked bf16 view of x: (batch, t_pad, hop), zero-padded so every block's
    # main + halo window is in bounds (ghost segments are sliced off below).
    t_pad = num_blocks * seg_block + h_blk
    needed = t_pad * hop
    if needed >= input_length:
        x_c = jnp.pad(x, ((0, 0), (0, needed - input_length)))
    else:
        x_c = x[:, :needed]
    x_c = x_c.reshape(batch, t_pad, hop).astype(jnp.bfloat16)

    # bf16 weights (f32 MXU accumulation), classes padded to 128 lanes.
    w_p = jnp.zeros((segment_length, c_pad), jnp.bfloat16)
    w_p = w_p.at[:, :num_classes].set(w.astype(jnp.bfloat16))
    b_p = jnp.zeros((1, c_pad), jnp.float32)
    b_p = b_p.at[:, :num_classes].set(b.reshape(1, -1).astype(jnp.float32))

    kernel = _make_seg_linear_kernel(
        batch=batch, seg_block=seg_block, h_blk=h_blk,
        hop=hop, n_chunks=n_chunks, c_pad=c_pad)

    halo_ratio = seg_block // h_blk                  # integer by construction

    # Derived VMEM budget: double-buffered ins/outs + scratch, with headroom.
    blk_main = batch * seg_block * hop * 2           # bf16
    blk_halo = batch * h_blk * hop * 2
    blk_out = batch * seg_block * c_pad * 4
    blk_w = segment_length * c_pad * 2
    blk_b = c_pad * 4
    win_bytes = batch * (seg_block + h_blk) * hop * 2
    vmem_limit = int(1.5 * (2 * (blk_main + blk_halo + blk_out + blk_w + blk_b)
                            + win_bytes)) + (4 << 20)
    vmem_limit = max(16 << 20, min(vmem_limit, 96 << 20))

    out = pl.pallas_call(
        kernel,
        out_shape=jax.ShapeDtypeStruct((batch, s_pad, c_pad), jnp.float32),
        grid=(num_blocks,),
        in_specs=[
            # main chunks of block i
            pl.BlockSpec((batch, seg_block, hop), lambda i: (0, i, 0)),
            # halo: the first h_blk chunks of block i+1 (same array, 2nd spec)
            pl.BlockSpec((batch, h_blk, hop),
                         lambda i: (0, (i + 1) * halo_ratio, 0)),
            pl.BlockSpec((segment_length, c_pad), lambda i: (0, 0)),
            pl.BlockSpec((1, c_pad), lambda i: (0, 0)),
        ],
        # Lane-dense (batch, seg_block, 128k) block written straight into the
        # final (B, S, C) layout -> unmasked stores, no wrapper transpose.
        out_specs=pl.BlockSpec((batch, seg_block, c_pad), lambda i: (0, i, 0)),
        scratch_shapes=[
            pltpu.VMEM((batch, seg_block + h_blk, hop), jnp.bfloat16),
        ],
        compiler_params=pltpu.CompilerParams(
            dimension_semantics=("parallel",),   # disjoint output blocks per step
            vmem_limit_bytes=vmem_limit,
        ),
    )(x_c, x_c, w_p, b_p)

    # TODO(synk): downstream consumers could take the padded (B, s_pad, c_pad)
    # array directly and avoid this extra HBM round trip.
    return out[:, :num_segments, :num_classes].astype(x.dtype)


def cut_input_into_segments_forward(x, w, b, *,
                                    max_input_length, segment_length, hop_size):
    """JAX/Pallas equivalent of CutInputIntoSegmentsWrapper.forward with a
    linear model. x: (batch, input_length) -> (batch, num_segments, C)."""
    batch, input_length = x.shape

    if input_length <= max_input_length:
        # PyTorch: return self.model(x).unsqueeze(1)
        # TODO(synk): an arbitrary wrapped model handling variable-length short
        # inputs has no single Pallas equivalent; the linear head requires
        # input_length == segment_length, modeled as one full segment.
        assert input_length == segment_length, (
            "short-path requires input_length == segment_length for the linear model")
        return _seg_linear(x, w, b, segment_length=segment_length,
                           hop_size=segment_length, num_segments=1)

    # Trailing samples that do not fill a full segment are dropped,
    # matching the PyTorch range(...) indexing.
    num_segments = len(range(0, input_length - segment_length + 1, hop_size))
    return _seg_linear(x, w, b, segment_length=segment_length,
                       hop_size=hop_size, num_segments=num_segments)


def _reference(x, w, b, *, max_input_length, segment_length, hop_size):
    batch, input_length = x.shape
    if input_length <= max_input_length:
        return (x @ w + b)[:, None, :]
    idx = list(range(0, input_length - segment_length + 1, hop_size))
    segs = jnp.stack([x[:, i:i + segment_length] for i in idx])      # (S, B, L)
    outs = segs.reshape(-1, segment_length) @ w + b                   # (S*B, C)
    return jnp.transpose(outs.reshape(len(idx), batch, -1), (1, 0, 2))


if __name__ == "__main__":
    # Small, deterministic example.
    batch = 2
    input_length = 256
    max_input_length = 128
    segment_length = 128
    hop_size = 64
    num_classes = 32

    key = jax.random.PRNGKey(0)
    kx, kw, kb = jax.random.split(key, 3)
    x = jax.random.normal(kx, (batch, input_length), dtype=jnp.float32)
    w = (jax.random.normal(kw, (segment_length, num_classes), dtype=jnp.float32)
         * (1.0 / segment_length ** 0.5))
    b = jax.random.normal(kb, (1, num_classes), dtype=jnp.float32) * 0.01

    fwd = functools.partial(cut_input_into_segments_forward,
                            max_input_length=max_input_length,
                            segment_length=segment_length,
                            hop_size=hop_size)

    # Long path: overlapping segmentation.
    out = jax.block_until_ready(fwd(x, w, b))
    ref = _reference(x, w, b,
                     max_input_length=max_input_length,
                     segment_length=segment_length,
                     hop_size=hop_size)
    expected_segments = (input_length - segment_length) // hop_size + 1
    assert out.shape == (batch, expected_segments, num_classes), out.shape
    # bf16 MXU operands (f32 accumulate) -> relaxed tolerance vs. f32 reference.
    assert jnp.allclose(out, ref, atol=5e-2, rtol=5e-2)

    # Short path: input_length <= max_input_length -> model(x).unsqueeze(1).
    x_short = x[:, :segment_length]
    out_s = jax.block_until_ready(fwd(x_short, w, b))
    ref_s = _reference(x_short, w, b,
                       max_input_length=max_input_length,
                       segment_length=segment_length,
                       hop_size=hop_size)
    assert out_s.shape == (batch, 1, num_classes), out_s.shape
    assert jnp.allclose(out_s, ref_s, atol=5e-2, rtol=5e-2)

    print("KERNEL_OK")
</pallas_src>

<mosaic_0001>
module attributes {stable_mosaic.version = 11 : i64} {
  func.func @kernel(%arg0: i32, %arg1: memref<2x8x64xbf16, #tpu.memory_space<vmem>>, %arg2: memref<2x8x64xbf16, #tpu.memory_space<vmem>>, %arg3: memref<128x128xbf16, #tpu.memory_space<vmem>>, %arg4: memref<1x128xf32, #tpu.memory_space<vmem>>, %arg5: memref<2x8x128xf32, #tpu.memory_space<vmem>>, %arg6: memref<2x16x64xbf16, #tpu.memory_space<vmem>>) attributes {dimension_semantics = [#tpu.dimension_semantics<parallel>], iteration_bounds = array<i64: 1>, scalar_prefetch = 0 : i64, scratch_operands = 1 : i64, tpu.core_type = #tpu.core_type<tc>, window_params = [{transform_indices = @transform_0, window_bounds = array<i64: 2, 8, 64>}, {transform_indices = @transform_1, window_bounds = array<i64: 2, 8, 64>}, {pipeline_mode = #tpu.pipeline_mode<synchronous>, transform_indices = @transform_2, window_bounds = array<i64: 128, 128>}, {pipeline_mode = #tpu.pipeline_mode<synchronous>, transform_indices = @transform_3, window_bounds = array<i64: 1, 128>}, {transform_indices = @transform_4, window_bounds = array<i64: 2, 8, 128>}]} {
    %c0 = arith.constant 0 : index
    %c0_0 = arith.constant 0 : index
    %c0_1 = arith.constant 0 : index
    %0 = vector.load %arg1[%c0, %c0_0, %c0_1] : memref<2x8x64xbf16, #tpu.memory_space<vmem>>, vector<2x8x64xbf16>
    %c0_2 = arith.constant 0 : index
    %c0_3 = arith.constant 0 : index
    %c0_4 = arith.constant 0 : index
    %1 = vector.load %arg6[%c0_2, %c0_3, %c0_4] : memref<2x16x64xbf16, #tpu.memory_space<vmem>>, vector<2x8x64xbf16>
    tpu.vector_store %arg6[%c0_2, %c0_3, %c0_4], %0 {strides = array<i32>} : memref<2x16x64xbf16, #tpu.memory_space<vmem>>, vector<2x8x64xbf16>,
    %c0_5 = arith.constant 0 : index
    %c0_6 = arith.constant 0 : index
    %c0_7 = arith.constant 0 : index
    %2 = vector.load %arg2[%c0_5, %c0_6, %c0_7] : memref<2x8x64xbf16, #tpu.memory_space<vmem>>, vector<2x8x64xbf16>
    %c0_8 = arith.constant 0 : index
    %c8 = arith.constant 8 : index
    %c0_9 = arith.constant 0 : index
    %3 = vector.load %arg6[%c0_8, %c8, %c0_9] : memref<2x16x64xbf16, #tpu.memory_space<vmem>>, vector<2x8x64xbf16>
    tpu.vector_store %arg6[%c0_8, %c8, %c0_9], %2 {strides = array<i32>} : memref<2x16x64xbf16, #tpu.memory_space<vmem>>, vector<2x8x64xbf16>,
    %c0_10 = arith.constant 0 : index
    %c0_11 = arith.constant 0 : index
    %4 = vector.load %arg3[%c0_10, %c0_11] : memref<128x128xbf16, #tpu.memory_space<vmem>>, vector<64x128xbf16>
    %c0_12 = arith.constant 0 : index
    %c0_13 = arith.constant 0 : index
    %c0_14 = arith.constant 0 : index
    %5 = vector.load %arg6[%c0_12, %c0_13, %c0_14] : memref<2x16x64xbf16, #tpu.memory_space<vmem>>, vector<1x8x64xbf16>
    %6 = vector.shape_cast %5 : vector<1x8x64xbf16> to vector<8x64xbf16>
    %cst = arith.constant dense<0.000000e+00> : vector<8x128xf32>
    %7 = tpu.matmul %6, %4, %cst {dimension_numbers = #tpu.dot_dimension_numbers<[1], [0], [0], [1], [0, 0, 1, 1], [], []>} : vector<8x64xbf16>, vector<64x128xbf16>, vector<8x128xf32> -> vector<8x128xf32>
    %c0_15 = arith.constant 0 : index
    %c0_16 = arith.constant 0 : index
    %8 = vector.load %arg4[%c0_15, %c0_16] : memref<1x128xf32, #tpu.memory_space<vmem>>, vector<1x128xf32>
    %9 = vector.broadcast %8 : vector<1x128xf32> to vector<8x128xf32>
    %10 = arith.addf %7, %9 : vector<8x128xf32>
    %c0_17 = arith.constant 0 : index
    %c0_18 = arith.constant 0 : index
    %c0_19 = arith.constant 0 : index
    %11 = vector.load %arg5[%c0_17, %c0_18, %c0_19] : memref<2x8x128xf32, #tpu.memory_space<vmem>>, vector<1x8x128xf32>
    %12 = vector.shape_cast %11 : vector<1x8x128xf32> to vector<8x128xf32>
    %13 = vector.shape_cast %10 : vector<8x128xf32> to vector<1x8x128xf32>
    tpu.vector_store %arg5[%c0_17, %c0_18, %c0_19], %13 {strides = array<i32>} : memref<2x8x128xf32, #tpu.memory_space<vmem>>, vector<1x8x128xf32>,
    %c1 = arith.constant 1 : index
    %c0_20 = arith.constant 0 : index
    %c0_21 = arith.constant 0 : index
    %14 = vector.load %arg6[%c1, %c0_20, %c0_21] : memref<2x16x64xbf16, #tpu.memory_space<vmem>>, vector<1x8x64xbf16>
    %15 = vector.shape_cast %14 : vector<1x8x64xbf16> to vector<8x64xbf16>
    %cst_22 = arith.constant dense<0.000000e+00> : vector<8x128xf32>
    %16 = tpu.matmul %15, %4, %cst_22 {dimension_numbers = #tpu.dot_dimension_numbers<[1], [0], [0], [1], [0, 0, 1, 1], [], []>} : vector<8x64xbf16>, vector<64x128xbf16>, vector<8x128xf32> -> vector<8x128xf32>
    %c0_23 = arith.constant 0 : index
    %c0_24 = arith.constant 0 : index
    %17 = vector.load %arg4[%c0_23, %c0_24] : memref<1x128xf32, #tpu.memory_space<vmem>>, vector<1x128xf32>
    %18 = vector.broadcast %17 : vector<1x128xf32> to vector<8x128xf32>
    %19 = arith.addf %16, %18 : vector<8x128xf32>
    %c1_25 = arith.constant 1 : index
    %c0_26 = arith.constant 0 : index
    %c0_27 = arith.constant 0 : index
    %20 = vector.load %arg5[%c1_25, %c0_26, %c0_27] : memref<2x8x128xf32, #tpu.memory_space<vmem>>, vector<1x8x128xf32>
    %21 = vector.shape_cast %20 : vector<1x8x128xf32> to vector<8x128xf32>
    %22 = vector.shape_cast %19 : vector<8x128xf32> to vector<1x8x128xf32>
    tpu.vector_store %arg5[%c1_25, %c0_26, %c0_27], %22 {strides = array<i32>} : memref<2x8x128xf32, #tpu.memory_space<vmem>>, vector<1x8x128xf32>,
    %c64 = arith.constant 64 : index
    %c0_28 = arith.constant 0 : index
    %23 = vector.load %arg3[%c64, %c0_28] : memref<128x128xbf16, #tpu.memory_space<vmem>>, vector<64x128xbf16>
    %c0_29 = arith.constant 0 : index
    %c1_30 = arith.constant 1 : index
    %c0_31 = arith.constant 0 : index
    %24 = vector.load %arg6[%c0_29, %c1_30, %c0_31] : memref<2x16x64xbf16, #tpu.memory_space<vmem>>, vector<1x8x64xbf16>
    %25 = vector.shape_cast %24 : vector<1x8x64xbf16> to vector<8x64xbf16>
    %cst_32 = arith.constant dense<0.000000e+00> : vector<8x128xf32>
    %26 = tpu.matmul %25, %23, %cst_32 {dimension_numbers = #tpu.dot_dimension_numbers<[1], [0], [0], [1], [0, 0, 1, 1], [], []>} : vector<8x64xbf16>, vector<64x128xbf16>, vector<8x128xf32> -> vector<8x128xf32>
    %c0_33 = arith.constant 0 : index
    %c0_34 = arith.constant 0 : index
    %c0_35 = arith.constant 0 : index
    %27 = vector.load %arg5[%c0_33, %c0_34, %c0_35] : memref<2x8x128xf32, #tpu.memory_space<vmem>>, vector<1x8x128xf32>
    %28 = vector.shape_cast %27 : vector<1x8x128xf32> to vector<8x128xf32>
    %29 = arith.addf %28, %26 : vector<8x128xf32>
    %c0_36 = arith.constant 0 : index
    %c0_37 = arith.constant 0 : index
    %c0_38 = arith.constant 0 : index
    %30 = vector.load %arg5[%c0_36, %c0_37, %c0_38] : memref<2x8x128xf32, #tpu.memory_space<vmem>>, vector<1x8x128xf32>
    %31 = vector.shape_cast %30 : vector<1x8x128xf32> to vector<8x128xf32>
    %32 = vector.shape_cast %29 : vector<8x128xf32> to vector<1x8x128xf32>
    tpu.vector_store %arg5[%c0_36, %c0_37, %c0_38], %32 {strides = array<i32>} : memref<2x8x128xf32, #tpu.memory_space<vmem>>, vector<1x8x128xf32>,
    %c1_39 = arith.constant 1 : index
    %c1_40 = arith.constant 1 : index
    %c0_41 = arith.constant 0 : index
    %33 = vector.load %arg6[%c1_39, %c1_40, %c0_41] : memref<2x16x64xbf16, #tpu.memory_space<vmem>>, vector<1x8x64xbf16>
    %34 = vector.shape_cast %33 : vector<1x8x64xbf16> to vector<8x64xbf16>
    %cst_42 = arith.constant dense<0.000000e+00> : vector<8x128xf32>
    %35 = tpu.matmul %34, %23, %cst_42 {dimension_numbers = #tpu.dot_dimension_numbers<[1], [0], [0], [1], [0, 0, 1, 1], [], []>} : vector<8x64xbf16>, vector<64x128xbf16>, vector<8x128xf32> -> vector<8x128xf32>
    %c1_43 = arith.constant 1 : index
    %c0_44 = arith.constant 0 : index
    %c0_45 = arith.constant 0 : index
    %36 = vector.load %arg5[%c1_43, %c0_44, %c0_45] : memref<2x8x128xf32, #tpu.memory_space<vmem>>, vector<1x8x128xf32>
    %37 = vector.shape_cast %36 : vector<1x8x128xf32> to vector<8x128xf32>
    %38 = arith.addf %37, %35 : vector<8x128xf32>
    %c1_46 = arith.constant 1 : index
    %c0_47 = arith.constant 0 : index
    %c0_48 = arith.constant 0 : index
    %39 = vector.load %arg5[%c1_46, %c0_47, %c0_48] : memref<2x8x128xf32, #tpu.memory_space<vmem>>, vector<1x8x128xf32>
    %40 = vector.shape_cast %39 : vector<1x8x128xf32> to vector<8x128xf32>
    %41 = vector.shape_cast %38 : vector<8x128xf32> to vector<1x8x128xf32>
    tpu.vector_store %arg5[%c1_46, %c0_47, %c0_48], %41 {strides = array<i32>} : memref<2x8x128xf32, #tpu.memory_space<vmem>>, vector<1x8x128xf32>,
    return
  }
  func.func @transform_0(%arg0: i32) -> (i32, i32, i32) {
    %c0_i32 = arith.constant 0 : i32
    %c0_i32_0 = arith.constant 0 : i32
    %c0_i32_1 = arith.constant 0 : i32
    return %c0_i32, %arg0, %c0_i32_0 : i32, i32, i32
  }
  func.func @transform_1(%arg0: i32) -> (i32, i32, i32) {
    %c1_i32 = arith.constant 1 : i32
    %0 = arith.addi %arg0, %c1_i32 : i32
    %c1_i32_0 = arith.constant 1 : i32
    %1 = arith.muli %0, %c1_i32_0 : i32
    %c0_i32 = arith.constant 0 : i32
    %c0_i32_1 = arith.constant 0 : i32
    %c0_i32_2 = arith.constant 0 : i32
    return %c0_i32, %1, %c0_i32_1 : i32, i32, i32
  }
  func.func @transform_2(%arg0: i32) -> (i32, i32) {
    %c0_i32 = arith.constant 0 : i32
    %c0_i32_0 = arith.constant 0 : i32
    %c0_i32_1 = arith.constant 0 : i32
    return %c0_i32, %c0_i32_0 : i32, i32
  }
  func.func @transform_3(%arg0: i32) -> (i32, i32) {
    %c0_i32 = arith.constant 0 : i32
    %c0_i32_0 = arith.constant 0 : i32
    %c0_i32_1 = arith.constant 0 : i32
    return %c0_i32, %c0_i32_0 : i32, i32
  }
  func.func @transform_4(%arg0: i32) -> (i32, i32, i32) {
    %c0_i32 = arith.constant 0 : i32
    %c0_i32_0 = arith.constant 0 : i32
    %c0_i32_1 = arith.constant 0 : i32
    return %c0_i32, %arg0, %c0_i32_0 : i32, i32, i32
  }
}

</mosaic_0001>

<llo_original>
// kernel: tpu_custom_call.1
$region0: #{tpu_custom_call.1}
  #allocation0 [shape = 'u32[]', space=smem, size = 0x4, offset = 0x4, fixed_abs, tag = 'smem constant byte address 0x4 - core index']
  #allocation1 [shape = 'u32[72,128]{1,0:T(1,128)}', space=vmem, size = 0x9000, scoped, tag = 'internal scratch']
  #allocation2 [shape = 'bf16[2,16,64]{2,1,0:T(8,128)(2,1)}', space=vmem, size = 0x2000, scoped, tag = 'scratch operand']
  %s0 = inlined_call_operand.hbm [shape: bf16[2,16,64], index: 0, kind: input, shape index: {}]
  %s1 = inlined_call_operand.hbm [shape: bf16[2,16,64], index: 1, kind: input, shape index: {}]
  %s2 = inlined_call_operand.hbm [shape: bf16[128,128], index: 2, kind: input, shape index: {}]
  %s3 = inlined_call_operand.vmem [shape: f32[1,128], index: 3, kind: input, shape index: {}]
  %s4 = inlined_call_operand.hbm [shape: f32[2,8,128], index: 4, kind: output, shape index: {}]
  %s5 = sld [smem:[#allocation0]]
  $region38: #{tpu_custom_call.1} parent=0
    _
  %s7 = ssub.s32 1, %s5
  %s8 = scalar_select 0, %s7, %s5
  $region1: #{tpu_custom_call.1} parent=0
    #allocation3 [shape = 'u8[4096]{0}', space=vmem, size = 0x1000, scoped, tag = 'input window, operand 0, single buffered']
    #allocation4 [shape = 's32[1]{0}', space=sflag, size = 0x4, scoped, tag = 'scoped memory for tpu_custom_call.1']
    #allocation5 [shape = 's32[1]{0}', space=sflag, size = 0x4, scoped, tag = 'scoped memory for tpu_custom_call.1']
    #allocation6 [shape = 'u8[4096]{0}', space=vmem, size = 0x1000, scoped, tag = 'input window, operand 1, single buffered']
    #allocation7 [shape = 's32[1]{0}', space=sflag, size = 0x4, scoped, tag = 'scoped memory for tpu_custom_call.1']
    #allocation8 [shape = 'u8[32768]{0}', space=vmem, size = 0x8000, scoped, tag = 'input window, operand 2, single buffered']
    #allocation9 [shape = 'u8[8192]{0}', space=vmem, size = 0x2000, scoped, tag = 'output window, operand 0, single buffered']
    %9 = vsyncpa [#allocation4], 0
    %10 = vsyncpa [#allocation7], 0
    %11 = vsyncpa [#allocation5], 0
    // Predicated region
    $region2: #{tpu_custom_call.1} parent=1 // pred_check
      _
    $region3: #{tpu_custom_call.1} parent=1 // pred_check_branch
      %13 = sbr.rel (0) target = $region5
    $region4: #{tpu_custom_call.1} parent=1 // pred_region
      %15 = vsyncadd [#allocation4], 0
      %s16 = sshll.u32 %s0, 4
      %s17 = int_to_ptr.hbm [resolvable:$true] %s16
      %s18 = sshll.u32 [#allocation3], 4
      %s19 = int_to_ptr.vmem [resolvable:$true] %s18
      %24 = dma.hbm_to_vmem [thread:$0]  %s17, 128, %s19, [#allocation4], 128, 64, 4
    $region5: #{tpu_custom_call.1} parent=1 // pred_fallthru
      _
    // Predicated region
    $region6: #{tpu_custom_call.1} parent=1 // pred_check
      _
    $region7: #{tpu_custom_call.1} parent=1 // pred_check_branch
      %26 = sbr.rel (0) target = $region9
    $region8: #{tpu_custom_call.1} parent=1 // pred_region
      %s27 = sadd.s32 0, 1
      %29 = vsyncadd [#allocation7], 0
      %s30 = smul.addr %s27, 4
      %s31 = scalar_lea.hbm %s1, %s30
      %s32 = sshll.u32 %s31, 4
      %s33 = int_to_ptr.hbm [resolvable:$true] %s32
      %s34 = sshll.u32 [#allocation6], 4
      %s35 = int_to_ptr.vmem [resolvable:$true] %s34
      %40 = dma.hbm_to_vmem [thread:$0]  %s33, 128, %s35, [#allocation7], 128, 64, 4
    $region9: #{tpu_custom_call.1} parent=1 // pred_fallthru
      _
    // Predicated region
    $region10: #{tpu_custom_call.1} parent=1 // pred_check
      _
    $region11: #{tpu_custom_call.1} parent=1 // pred_check_branch
      %42 = sbr.rel (0) target = $region13
    $region12: #{tpu_custom_call.1} parent=1 // pred_region
      %44 = vsyncadd [#allocation7], 0
      %s45 = sshll.u32 %s2, 4
      %s46 = int_to_ptr.hbm [resolvable:$true] %s45
      %s47 = sshll.u32 [#allocation8], 4
      %s48 = int_to_ptr.vmem [resolvable:$true] %s47
      %53 = dma.hbm_to_vmem [thread:$0]  %s46, 1024, %s48, [#allocation7], 64, 64, 4
    $region13: #{tpu_custom_call.1} parent=1 // pred_fallthru
      _
    // Predicated region
    $region14: #{tpu_custom_call.1} parent=1 // pred_check
      _
    $region15: #{tpu_custom_call.1} parent=1 // pred_check_branch
      %55 = sbr.rel (0) target = $region17
    $region16: #{tpu_custom_call.1} parent=1 // pred_region
      _
    $region17: #{tpu_custom_call.1} parent=1 // pred_fallthru
      _
    // Predicated region
    $region18: #{tpu_custom_call.1} parent=1 // pred_check
      _
    $region19: #{tpu_custom_call.1} parent=1 // pred_check_branch
      %57 = sbr.rel (0) target = $region21
    $region20: #{tpu_custom_call.1} parent=1 // pred_region
      %59 = dma.done [#allocation4], 128
    $region21: #{tpu_custom_call.1} parent=1 // pred_fallthru
      _
    // Predicated region
    $region22: #{tpu_custom_call.1} parent=1 // pred_check
      _
    $region23: #{tpu_custom_call.1} parent=1 // pred_check_branch
      %61 = sbr.rel (0) target = $region25
    $region24: #{tpu_custom_call.1} parent=1 // pred_region
      %63 = dma.done [#allocation7], 128
    $region25: #{tpu_custom_call.1} parent=1 // pred_fallthru
      _
    // Predicated region
    $region26: #{tpu_custom_call.1} parent=1 // pred_check
      _
    $region27: #{tpu_custom_call.1} parent=1 // pred_check_branch
      %65 = sbr.rel (0) target = $region29
    $region28: #{tpu_custom_call.1} parent=1 // pred_region
      %67 = dma.done [#allocation7], 1024
    $region29: #{tpu_custom_call.1} parent=1 // pred_fallthru
      _
    %s68 = sadd.s32 0, 1
    %v70 = vld [vmem:[#allocation3] sm:$0xf]
    %v71 = vld [vmem:[#allocation3 + $0x4] sm:$0xf]
    %vm72 = vcmask 519168
    %73 = vst.msk [vmem:[#allocation2] sm:$0xf] %vm72, %v70
    %74 = vst.msk [vmem:[#allocation2 + $0x8] sm:$0xf] %vm72, %v71
    %v75 = vld [vmem:[#allocation6] sm:$0xf]
    %v76 = vld [vmem:[#allocation6 + $0x4] sm:$0xf]
    %77 = vst.msk [vmem:[#allocation2 + $0x4] sm:$0xf] %vm72, %v75
    %78 = vst.msk [vmem:[#allocation2 + $0xc] sm:$0xf] %vm72, %v76
    %v79 = vld [vmem:[#allocation8] sm:$0xf]
    %v80 = vld [vmem:[#allocation8 + $0x4] sm:$0xf]
    %v81 = vld [vmem:[#allocation8 + $0x8] sm:$0xf]
    %v82 = vld [vmem:[#allocation8 + $0xc] sm:$0xf]
    %v83 = vld [vmem:[#allocation8 + $0x10] sm:$0xf]
    %v84 = vld [vmem:[#allocation8 + $0x14] sm:$0xf]
    %v85 = vld [vmem:[#allocation8 + $0x18] sm:$0xf]
    %v86 = vld [vmem:[#allocation8 + $0x1c] sm:$0xf]
    %v87 = vld [vmem:[#allocation2] sm:$0xf]
    %v88 = vld [vmem:[%s3] sm:$0x1]
    %v90 = vperm.slane %v88, 0
    %v100 = vunpack.c.l.b16 %v79
    %v101 = vunpack.c.l.b16 %v80
    %v102 = vunpack.c.l.b16 %v81
    %v103 = vunpack.c.l.b16 %v82
    %v104 = vunpack.c.l.b16 %v83
    %v105 = vunpack.c.l.b16 %v84
    %v106 = vunpack.c.l.b16 %v85
    %v107 = vunpack.c.l.b16 %v86
    %v108 = vpack.c.b16 %v101, %v100
    %v109 = vpack.c.b16 %v103, %v102
    %v110 = vpack.c.b16 %v105, %v104
    %v111 = vpack.c.b16 %v107, %v106
    %vm116 = vcmask 523264
    %v118 = vsel %vm116, %v87, 0
    %120 = vmatpush.bf16.msra.mxu0 0
    %121 = vmatpush.bf16.msra.mxu0 0
    %122 = vmatpush.bf16.msra.mxu0 0
    %123 = vmatpush.bf16.msra.mxu0 0
    %124 = vmatpush.bf16.msra.mxu0 %v111
    %125 = vmatpush.bf16.msra.mxu0 %v110
    %126 = vmatpush.bf16.msra.mxu0 %v109
    %127 = vmatpush.bf16.msra.mxu0 %v108
    %128 = vmatmul.bf16.gmra.mxu0 %v118
    %v129 = vpop.f32.mrf.mxu0
    %v130 = vadd.f32 %v90, %v129
    %v131 = vpop.f32.mrf.mxu0
    %132 = vdwg.mxu0
    %133 = vst [vmem:[#allocation9] sm:$0xff] %v130
    %s134 = scalar_lea.vmem [#allocation2], 8
    %v135 = vld [vmem:[%s134] sm:$0xf]
    %v136 = vld [vmem:[%s3] sm:$0x1]
    %v138 = vperm.slane %v136, 0
    %v141 = vsel %vm116, %v135, 0
    %143 = vmatpush.bf16.msra.mxu0 0
    %144 = vmatpush.bf16.msra.mxu0 0
    %145 = vmatpush.bf16.msra.mxu0 0
    %146 = vmatpush.bf16.msra.mxu0 0
    %147 = vmatpush.bf16.msra.mxu0 %v111
    %148 = vmatpush.bf16.msra.mxu0 %v110
    %149 = vmatpush.bf16.msra.mxu0 %v109
    %150 = vmatpush.bf16.msra.mxu0 %v108
    %151 = vmatmul.bf16.gmra.mxu0 %v141
    %v152 = vpop.f32.mrf.mxu0
    %v153 = vadd.f32 %v138, %v152
    %v154 = vpop.f32.mrf.mxu0
    %155 = vdwg.mxu0
    %s156 = scalar_lea.vmem [#allocation9], 8
    %157 = vst [vmem:[%s156] sm:$0xff] %v153
    %v158 = vld [vmem:[#allocation8 + $0x20] sm:$0xf]
    %v159 = vld [vmem:[#allocation8 + $0x24] sm:$0xf]
    %v160 = vld [vmem:[#allocation8 + $0x28] sm:$0xf]
    %v161 = vld [vmem:[#allocation8 + $0x2c] sm:$0xf]
    %v162 = vld [vmem:[#allocation8 + $0x30] sm:$0xf]
    %v163 = vld [vmem:[#allocation8 + $0x34] sm:$0xf]
    %v164 = vld [vmem:[#allocation8 + $0x38] sm:$0xf]
    %v165 = vld [vmem:[#allocation8 + $0x3c] sm:$0xf]
    %v166 = vld [vmem:[#allocation2] sm:$0xf]
    %v167 = vld [vmem:[#allocation2 + $0x4] sm:$0x1]
    %v170 = vunpack.c.l.b16 %v166
    %v171 = vunpack.c.l.b16 %v167
    %v172 = vpack.c.b16 %v171, %v170
    %v174 = vshrl.u32 %v172, 16
    %v176 = vshll.u32 %v172, 16
    %v178 = vrot.slane %v176, 1
    %v179 = vor.u32 %v174, %v178
    %v188 = vunpack.c.l.b16 %v158
    %v189 = vunpack.c.l.b16 %v159
    %v190 = vunpack.c.l.b16 %v160
    %v191 = vunpack.c.l.b16 %v161
    %v192 = vunpack.c.l.b16 %v162
    %v193 = vunpack.c.l.b16 %v163
    %v194 = vunpack.c.l.b16 %v164
    %v195 = vunpack.c.l.b16 %v165
    %v196 = vpack.c.b16 %v189, %v188
    %v197 = vpack.c.b16 %v191, %v190
    %v198 = vpack.c.b16 %v193, %v192
    %v199 = vpack.c.b16 %v195, %v194
    %v205 = vsel %vm116, %v179, 0
    %207 = vmatpush.bf16.msra.mxu0 0
    %208 = vmatpush.bf16.msra.mxu0 0
    %209 = vmatpush.bf16.msra.mxu0 0
    %210 = vmatpush.bf16.msra.mxu0 0
    %211 = vmatpush.bf16.msra.mxu0 %v199
    %212 = vmatpush.bf16.msra.mxu0 %v198
    %213 = vmatpush.bf16.msra.mxu0 %v197
    %214 = vmatpush.bf16.msra.mxu0 %v196
    %215 = vmatmul.bf16.gmra.mxu0 %v205
    %v216 = vpop.f32.mrf.mxu0
    %v217 = vadd.f32 0.0, %v216
    %v218 = vpop.f32.mrf.mxu0
    %219 = vdwg.mxu0
    %v220 = vld [vmem:[#allocation9] sm:$0xff]
    %v221 = vadd.f32 %v220, %v217
    %222 = vst [vmem:[#allocation9] sm:$0xff] %v221
    %v223 = vld [vmem:[%s134] sm:$0xf]
    %v224 = vld [vmem:[%s134 + $0x4] sm:$0x1]
    %v227 = vunpack.c.l.b16 %v223
    %v228 = vunpack.c.l.b16 %v224
    %v229 = vpack.c.b16 %v228, %v227
    %v231 = vshrl.u32 %v229, 16
    %v233 = vshll.u32 %v229, 16
    %v235 = vrot.slane %v233, 1
    %v236 = vor.u32 %v231, %v235
    %v238 = vsel %vm116, %v236, 0
    %240 = vmatpush.bf16.msra.mxu0 0
    %241 = vmatpush.bf16.msra.mxu0 0
    %242 = vmatpush.bf16.msra.mxu0 0
    %243 = vmatpush.bf16.msra.mxu0 0
    %244 = vmatpush.bf16.msra.mxu0 %v199
    %245 = vmatpush.bf16.msra.mxu0 %v198
    %246 = vmatpush.bf16.msra.mxu0 %v197
    %247 = vmatpush.bf16.msra.mxu0 %v196
    %248 = vmatmul.bf16.gmra.mxu0 %v238
    %v249 = vpop.f32.mrf.mxu0
    %v250 = vadd.f32 0.0, %v249
    %v251 = vpop.f32.mrf.mxu0
    %252 = vdwg.mxu0
    %v253 = vld [vmem:[%s156] sm:$0xff]
    %v254 = vadd.f32 %v253, %v250
    %255 = vst [vmem:[%s156] sm:$0xff] %v254
    // Predicated region
    $region30: #{tpu_custom_call.1} parent=1 // pred_check
      _
    $region31: #{tpu_custom_call.1} parent=1 // pred_check_branch
      %257 = sbr.rel (0) target = $region33
    $region32: #{tpu_custom_call.1} parent=1 // pred_region
      %259 = vsyncadd [#allocation5], 0
      %s260 = sshll.u32 [#allocation9], 4
      %s261 = int_to_ptr.vmem [resolvable:$true] %s260
      %s262 = sshll.u32 %s4, 4
      %s263 = int_to_ptr.hbm [resolvable:$true] %s262
      %268 = dma.vmem_to_hbm [thread:$0]  %s261, 256, %s263, [#allocation5], 128, 128, 8
    $region33: #{tpu_custom_call.1} parent=1 // pred_fallthru
      _
    // Predicated region
    $region34: #{tpu_custom_call.1} parent=1 // pred_check
      _
    $region35: #{tpu_custom_call.1} parent=1 // pred_check_branch
      %270 = sbr.rel (0) target = $region37
    $region36: #{tpu_custom_call.1} parent=1 // pred_region
      %272 = dma.done [#allocation5], 256
    $region37: #{tpu_custom_call.1} parent=1 // pred_fallthru
      _
    %273 = vsyncpa [#allocation4], 1
    %274 = vsyncpa [#allocation7], 1
    %275 = vsyncpa [#allocation5], 1

</llo_original>
